<compile_context>
chip_gen: v7x
topology: tpu7x:2x2x1
jax: 0.10.0
libtpu: 0.0.40
codegen_flags: <defaults>
</compile_context>

<pallas_src>
import functools

import jax
import jax.numpy as jnp
from jax.experimental import pallas as pl
from jax.experimental.pallas import tpu as pltpu


def mlp_kernel(x_ref, w1_ref, b1_ref, w2_ref, b2_ref, o_ref):
    # linear1: (TILE_N, D_in) @ (D_in, H_p) + (1, H_p)
    h = jnp.dot(x_ref[...], w1_ref[...], preferred_element_type=jnp.float32)
    # sigmoid on the EUP (logistic primitive)
    h = jax.nn.sigmoid(h + b1_ref[...])
    # linear2: (TILE_N, H_p) @ (H_p, D_out_p) + (1, D_out_p)
    out = jnp.dot(h, w2_ref[...], preferred_element_type=jnp.float32)
    out = out + b2_ref[...]
    o_ref[...] = out.astype(o_ref.dtype)


def _round_up(x, m):
    return (x + m - 1) // m * m


def make_net_forward(w1, b1, w2, b2, *, tile_n=None):
    """Build a jitted forward(x) = linear2(sigmoid(linear1(x))).

    w1: (D_in, H)   b1: (1, H)     (weights stored pre-transposed: x @ W)
    w2: (H, D_out)  b2: (1, D_out)

    Parameters are zero-padded to lane-native shapes ONCE here, outside the
    per-call path.
    """
    D_in, H = w1.shape
    D_out = w2.shape[1]
    h_p = _round_up(H, 128)
    d_out_p = _round_up(D_out, 128)

    # One-time parameter padding (semantics-preserving: padded hidden lanes
    # give sigmoid(0)=0.5 but hit all-zero rows of W2 -> contribute 0;
    # padded output lanes are sliced away below).
    w1p = jnp.zeros((D_in, h_p), w1.dtype).at[:, :H].set(w1)
    b1p = jnp.zeros((1, h_p), b1.dtype).at[:, :H].set(b1.reshape(1, H))
    w2p = jnp.zeros((h_p, d_out_p), w2.dtype).at[:H, :D_out].set(w2)
    b2p = jnp.zeros((1, d_out_p), b2.dtype).at[:, :D_out].set(b2.reshape(1, D_out))

    # One N-tile per TensorCore: grid=(1,) on single-TC v5e/v6e,
    # grid=(2,) + "parallel" on dual-TC v7x.
    kind = jax.devices()[0].device_kind.lower()
    n_cores = 2 if "v7" in kind else 1

    @jax.jit
    def forward(x):
        N, d_in = x.shape
        assert d_in == D_in, "input feature dim mismatch"

        tn = tile_n
        if tn is None:
            tn = max(8, _round_up(pl.cdiv(N, n_cores), 8))
        n_p = _round_up(N, tn)
        # Only pad N if needed (fuses under jit; no-op for N % tn == 0).
        xp = x if n_p == N else jnp.zeros((n_p, D_in), x.dtype).at[:N, :].set(x)

        grid = (n_p // tn,)
        out_p = pl.pallas_call(
            mlp_kernel,
            out_shape=jax.ShapeDtypeStruct((n_p, d_out_p), x.dtype),
            grid=grid,
            in_specs=[
                # x tile marches over N; last dim = full D_in (unpadded, legal).
                pl.BlockSpec((tn, D_in), lambda i: (i, 0)),
                # weights/biases: constant block index -> fetched once,
                # VMEM-resident across grid steps.
                pl.BlockSpec((D_in, h_p), lambda i: (0, 0)),
                pl.BlockSpec((1, h_p), lambda i: (0, 0)),
                pl.BlockSpec((h_p, d_out_p), lambda i: (0, 0)),
                pl.BlockSpec((1, d_out_p), lambda i: (0, 0)),
            ],
            out_specs=pl.BlockSpec((tn, d_out_p), lambda i: (i, 0)),
            compiler_params=pltpu.CompilerParams(
                dimension_semantics=("parallel",),  # shard N-tiles across TCs
            ),
        )(xp, w1p, b1p, w2p, b2p)

        # Strip padding back to the logical output shape (fuses under jit).
        return out_p[:N, :D_out]

    return forward


if __name__ == "__main__":
    # Logical model dims match Net(D_in, H, D_out); N batched so there is a
    # meaningful amount of work per TensorCore.
    N, D_in, H, D_out = 512, 16, 32, 8

    key = jax.random.PRNGKey(0)
    kx, kw1, kb1, kw2, kb2 = jax.random.split(key, 5)

    x = jax.random.normal(kx, (N, D_in), dtype=jnp.float32)

    # PyTorch Linear stores (out, in); we keep the transposed (in, out) layout
    # for the kernel's x @ W convention. Init mimics nn.Linear's uniform init.
    bound1 = 1.0 / (D_in ** 0.5)
    w1 = jax.random.uniform(kw1, (D_in, H), minval=-bound1, maxval=bound1,
                            dtype=jnp.float32)
    b1 = jax.random.uniform(kb1, (1, H), minval=-bound1, maxval=bound1,
                            dtype=jnp.float32)
    bound2 = 1.0 / (H ** 0.5)
    w2 = jax.random.uniform(kw2, (H, D_out), minval=-bound2, maxval=bound2,
                            dtype=jnp.float32)
    b2 = jax.random.uniform(kb2, (1, D_out), minval=-bound2, maxval=bound2,
                            dtype=jnp.float32)

    net_forward = make_net_forward(w1, b1, w2, b2)

    out = net_forward(x)
    jax.block_until_ready(out)

    # Reference in plain JAX (same semantics as the PyTorch forward).
    ref = jax.nn.sigmoid(x @ w1 + b1) @ w2 + b2
    assert out.shape == (N, D_out)
    assert jnp.allclose(out, ref, atol=1e-5, rtol=1e-5)

    print("KERNEL_OK")
</pallas_src>

<mosaic_0001>
module attributes {stable_mosaic.version = 11 : i64} {
  func.func @mlp_kernel(%arg0: i32, %arg1: memref<512x16xf32, #tpu.memory_space<vmem>>, %arg2: memref<16x128xf32, #tpu.memory_space<vmem>>, %arg3: memref<1x128xf32, #tpu.memory_space<vmem>>, %arg4: memref<128x128xf32, #tpu.memory_space<vmem>>, %arg5: memref<1x128xf32, #tpu.memory_space<vmem>>, %arg6: memref<512x128xf32, #tpu.memory_space<vmem>>) attributes {dimension_semantics = [#tpu.dimension_semantics<parallel>], iteration_bounds = array<i64: 1>, scalar_prefetch = 0 : i64, scratch_operands = 0 : i64, tpu.core_type = #tpu.core_type<tc>, window_params = [{transform_indices = @transform_0, window_bounds = array<i64: 512, 16>}, {pipeline_mode = #tpu.pipeline_mode<synchronous>, transform_indices = @transform_1, window_bounds = array<i64: 16, 128>}, {pipeline_mode = #tpu.pipeline_mode<synchronous>, transform_indices = @transform_2, window_bounds = array<i64: 1, 128>}, {pipeline_mode = #tpu.pipeline_mode<synchronous>, transform_indices = @transform_3, window_bounds = array<i64: 128, 128>}, {pipeline_mode = #tpu.pipeline_mode<synchronous>, transform_indices = @transform_4, window_bounds = array<i64: 1, 128>}, {transform_indices = @transform_5, window_bounds = array<i64: 512, 128>}]} {
    %c0 = arith.constant 0 : index
    %c0_0 = arith.constant 0 : index
    %0 = vector.load %arg1[%c0, %c0_0] : memref<512x16xf32, #tpu.memory_space<vmem>>, vector<512x16xf32>
    %c0_1 = arith.constant 0 : index
    %c0_2 = arith.constant 0 : index
    %1 = vector.load %arg2[%c0_1, %c0_2] : memref<16x128xf32, #tpu.memory_space<vmem>>, vector<16x128xf32>
    %cst = arith.constant dense<0.000000e+00> : vector<512x128xf32>
    %2 = tpu.matmul %0, %1, %cst {dimension_numbers = #tpu.dot_dimension_numbers<[1], [0], [0], [1], [0, 0, 1, 1], [], []>} : vector<512x16xf32>, vector<16x128xf32>, vector<512x128xf32> -> vector<512x128xf32>
    %c0_3 = arith.constant 0 : index
    %c0_4 = arith.constant 0 : index
    %3 = vector.load %arg3[%c0_3, %c0_4] : memref<1x128xf32, #tpu.memory_space<vmem>>, vector<1x128xf32>
    %4 = vector.broadcast %3 : vector<1x128xf32> to vector<512x128xf32>
    %5 = arith.addf %2, %4 : vector<512x128xf32>
    %6 = arith.negf %5 : vector<512x128xf32>
    %7 = math.exp %6 : vector<512x128xf32>
    %cst_5 = arith.constant 1.000000e+00 : f32
    %8 = vector.broadcast %cst_5 : f32 to vector<512x128xf32>
    %9 = arith.addf %8, %7 : vector<512x128xf32>
    %10 = arith.divf %8, %9 : vector<512x128xf32>
    %c0_6 = arith.constant 0 : index
    %c0_7 = arith.constant 0 : index
    %11 = vector.load %arg4[%c0_6, %c0_7] : memref<128x128xf32, #tpu.memory_space<vmem>>, vector<128x128xf32>
    %cst_8 = arith.constant dense<0.000000e+00> : vector<512x128xf32>
    %12 = tpu.matmul %10, %11, %cst_8 {dimension_numbers = #tpu.dot_dimension_numbers<[1], [0], [0], [1], [0, 0, 1, 1], [], []>} : vector<512x128xf32>, vector<128x128xf32>, vector<512x128xf32> -> vector<512x128xf32>
    %c0_9 = arith.constant 0 : index
    %c0_10 = arith.constant 0 : index
    %13 = vector.load %arg5[%c0_9, %c0_10] : memref<1x128xf32, #tpu.memory_space<vmem>>, vector<1x128xf32>
    %14 = vector.broadcast %13 : vector<1x128xf32> to vector<512x128xf32>
    %15 = arith.addf %12, %14 : vector<512x128xf32>
    %c0_11 = arith.constant 0 : index
    %c0_12 = arith.constant 0 : index
    %16 = vector.load %arg6[%c0_11, %c0_12] : memref<512x128xf32, #tpu.memory_space<vmem>>, vector<512x128xf32>
    tpu.vector_store %arg6[%c0_11, %c0_12], %15 {strides = array<i32>} : memref<512x128xf32, #tpu.memory_space<vmem>>, vector<512x128xf32>,
    return
  }
  func.func @transform_0(%arg0: i32) -> (i32, i32) {
    %c0_i32 = arith.constant 0 : i32
    %c0_i32_0 = arith.constant 0 : i32
    return %arg0, %c0_i32 : i32, i32
  }
  func.func @transform_1(%arg0: i32) -> (i32, i32) {
    %c0_i32 = arith.constant 0 : i32
    %c0_i32_0 = arith.constant 0 : i32
    %c0_i32_1 = arith.constant 0 : i32
    return %c0_i32, %c0_i32_0 : i32, i32
  }
  func.func @transform_2(%arg0: i32) -> (i32, i32) {
    %c0_i32 = arith.constant 0 : i32
    %c0_i32_0 = arith.constant 0 : i32
    %c0_i32_1 = arith.constant 0 : i32
    return %c0_i32, %c0_i32_0 : i32, i32
  }
  func.func @transform_3(%arg0: i32) -> (i32, i32) {
    %c0_i32 = arith.constant 0 : i32
    %c0_i32_0 = arith.constant 0 : i32
    %c0_i32_1 = arith.constant 0 : i32
    return %c0_i32, %c0_i32_0 : i32, i32
  }
  func.func @transform_4(%arg0: i32) -> (i32, i32) {
    %c0_i32 = arith.constant 0 : i32
    %c0_i32_0 = arith.constant 0 : i32
    %c0_i32_1 = arith.constant 0 : i32
    return %c0_i32, %c0_i32_0 : i32, i32
  }
  func.func @transform_5(%arg0: i32) -> (i32, i32) {
    %c0_i32 = arith.constant 0 : i32
    %c0_i32_0 = arith.constant 0 : i32
    return %arg0, %c0_i32 : i32, i32
  }
}

</mosaic_0001>

<llo_original>
// kernel: forward.1
$region0: #{forward.1}
  #allocation0 [shape = 'u32[]', space=smem, size = 0x4, offset = 0x4, fixed_abs, tag = 'smem constant byte address 0x4 - core index']
  #allocation1 [shape = 'u32[144,128]{1,0:T(1,128)}', space=vmem, size = 0x12000, scoped, tag = 'internal scratch']
  %s0 = inlined_call_operand.vmem [shape: f32[512,16], index: 0, kind: input, shape index: {}]
  %s1 = inlined_call_operand.vmem [shape: f32[16,128], index: 1, kind: input, shape index: {}]
  %s2 = inlined_call_operand.vmem [shape: f32[1,128], index: 2, kind: input, shape index: {}]
  %s3 = inlined_call_operand.vmem [shape: f32[128,128], index: 3, kind: input, shape index: {}]
  %s4 = inlined_call_operand.vmem [shape: f32[1,128], index: 4, kind: input, shape index: {}]
  %s5 = inlined_call_operand.vmem [shape: f32[512,128], index: 5, kind: output, shape index: {}]
  %s6 = sld [smem:[#allocation0]]
  $region30: #{forward.1} parent=0
    _
  %s8 = ssub.s32 1, %s6
  %s9 = scalar_select 0, %s8, %s6
  // Predicated region
  $region2: #{forward.1} parent=0 // pred_check
    _
  $region3: #{forward.1} parent=0 // pred_check_branch
    %11 = sbr.rel (0) target = $region5
  $region4: #{forward.1} parent=0 // pred_region
    _
  $region5: #{forward.1} parent=0 // pred_fallthru
    _
  // Predicated region
  $region6: #{forward.1} parent=0 // pred_check
    _
  $region7: #{forward.1} parent=0 // pred_check_branch
    %13 = sbr.rel (0) target = $region9
  $region8: #{forward.1} parent=0 // pred_region
    _
  $region9: #{forward.1} parent=0 // pred_fallthru
    _
  // Predicated region
  $region10: #{forward.1} parent=0 // pred_check
    _
  $region11: #{forward.1} parent=0 // pred_check_branch
    %15 = sbr.rel (0) target = $region13
  $region12: #{forward.1} parent=0 // pred_region
    _
  $region13: #{forward.1} parent=0 // pred_fallthru
    _
  // Predicated region
  $region14: #{forward.1} parent=0 // pred_check
    _
  $region15: #{forward.1} parent=0 // pred_check_branch
    %17 = sbr.rel (0) target = $region17
  $region16: #{forward.1} parent=0 // pred_region
    _
  $region17: #{forward.1} parent=0 // pred_fallthru
    _
  // Predicated region
  $region18: #{forward.1} parent=0 // pred_check
    _
  $region19: #{forward.1} parent=0 // pred_check_branch
    %19 = sbr.rel (0) target = $region21
  $region20: #{forward.1} parent=0 // pred_region
    _
  $region21: #{forward.1} parent=0 // pred_fallthru
    _
  %v20 = vld [vmem:[%s0] sm:$0xff]
  %v21 = vld [vmem:[%s0 + $0x8] sm:$0xff]
  %v22 = vld [vmem:[%s0 + $0x10] sm:$0xff]
  %v23 = vld [vmem:[%s0 + $0x18] sm:$0xff]
  %v24 = vld [vmem:[%s0 + $0x20] sm:$0xff]
  %v25 = vld [vmem:[%s0 + $0x28] sm:$0xff]
  %v26 = vld [vmem:[%s0 + $0x30] sm:$0xff]
  %v27 = vld [vmem:[%s0 + $0x38] sm:$0xff]
  %v28 = vld [vmem:[%s0 + $0x40] sm:$0xff]
  %v29 = vld [vmem:[%s0 + $0x48] sm:$0xff]
  %v30 = vld [vmem:[%s0 + $0x50] sm:$0xff]
  %v31 = vld [vmem:[%s0 + $0x58] sm:$0xff]
  %v32 = vld [vmem:[%s0 + $0x60] sm:$0xff]
  %v33 = vld [vmem:[%s0 + $0x68] sm:$0xff]
  %v34 = vld [vmem:[%s0 + $0x70] sm:$0xff]
  %v35 = vld [vmem:[%s0 + $0x78] sm:$0xff]
  %v36 = vld [vmem:[%s0 + $0x80] sm:$0xff]
  %v37 = vld [vmem:[%s0 + $0x88] sm:$0xff]
  %v38 = vld [vmem:[%s0 + $0x90] sm:$0xff]
  %v39 = vld [vmem:[%s0 + $0x98] sm:$0xff]
  %v40 = vld [vmem:[%s0 + $0xa0] sm:$0xff]
  %v41 = vld [vmem:[%s0 + $0xa8] sm:$0xff]
  %v42 = vld [vmem:[%s0 + $0xb0] sm:$0xff]
  %v43 = vld [vmem:[%s0 + $0xb8] sm:$0xff]
  %v44 = vld [vmem:[%s0 + $0xc0] sm:$0xff]
  %v45 = vld [vmem:[%s0 + $0xc8] sm:$0xff]
  %v46 = vld [vmem:[%s0 + $0xd0] sm:$0xff]
  %v47 = vld [vmem:[%s0 + $0xd8] sm:$0xff]
  %v48 = vld [vmem:[%s0 + $0xe0] sm:$0xff]
  %v49 = vld [vmem:[%s0 + $0xe8] sm:$0xff]
  %v50 = vld [vmem:[%s0 + $0xf0] sm:$0xff]
  %v51 = vld [vmem:[%s0 + $0xf8] sm:$0xff]
  %v52 = vld [vmem:[%s0 + $0x100] sm:$0xff]
  %v53 = vld [vmem:[%s0 + $0x108] sm:$0xff]
  %v54 = vld [vmem:[%s0 + $0x110] sm:$0xff]
  %v55 = vld [vmem:[%s0 + $0x118] sm:$0xff]
  %v56 = vld [vmem:[%s0 + $0x120] sm:$0xff]
  %v57 = vld [vmem:[%s0 + $0x128] sm:$0xff]
  %v58 = vld [vmem:[%s0 + $0x130] sm:$0xff]
  %v59 = vld [vmem:[%s0 + $0x138] sm:$0xff]
  %v60 = vld [vmem:[%s0 + $0x140] sm:$0xff]
  %v61 = vld [vmem:[%s0 + $0x148] sm:$0xff]
  %v62 = vld [vmem:[%s0 + $0x150] sm:$0xff]
  %v63 = vld [vmem:[%s0 + $0x158] sm:$0xff]
  %v64 = vld [vmem:[%s0 + $0x160] sm:$0xff]
  %v65 = vld [vmem:[%s0 + $0x168] sm:$0xff]
  %v66 = vld [vmem:[%s0 + $0x170] sm:$0xff]
  %v67 = vld [vmem:[%s0 + $0x178] sm:$0xff]
  %v68 = vld [vmem:[%s0 + $0x180] sm:$0xff]
  %v69 = vld [vmem:[%s0 + $0x188] sm:$0xff]
  %v70 = vld [vmem:[%s0 + $0x190] sm:$0xff]
  %v71 = vld [vmem:[%s0 + $0x198] sm:$0xff]
  %v72 = vld [vmem:[%s0 + $0x1a0] sm:$0xff]
  %v73 = vld [vmem:[%s0 + $0x1a8] sm:$0xff]
  %v74 = vld [vmem:[%s0 + $0x1b0] sm:$0xff]
  %v75 = vld [vmem:[%s0 + $0x1b8] sm:$0xff]
  %v76 = vld [vmem:[%s0 + $0x1c0] sm:$0xff]
  %v77 = vld [vmem:[%s0 + $0x1c8] sm:$0xff]
  %v78 = vld [vmem:[%s0 + $0x1d0] sm:$0xff]
  %v79 = vld [vmem:[%s0 + $0x1d8] sm:$0xff]
  %v80 = vld [vmem:[%s0 + $0x1e0] sm:$0xff]
  %v81 = vld [vmem:[%s0 + $0x1e8] sm:$0xff]
  %v82 = vld [vmem:[%s0 + $0x1f0] sm:$0xff]
  %v83 = vld [vmem:[%s0 + $0x1f8] sm:$0xff]
  %v84 = vld [vmem:[%s1] sm:$0xff]
  %v85 = vld [vmem:[%s1 + $0x8] sm:$0xff]
  %v86 = vld [vmem:[%s2] sm:$0x1]
  %v88 = vlaneseq
  %v89 = vshrl.u32 %v88, 7
  %v90 = vsub.s32 0, %v89
  %v91 = vrot.slane %v86, %v90
  %vm93 = vcmask 130048
  %v95 = vsel %vm93, %v20, 0
  %v98 = vsel %vm93, %v21, 0
  %v101 = vsel %vm93, %v22, 0
  %v104 = vsel %vm93, %v23, 0
  %v107 = vsel %vm93, %v24, 0
  %v110 = vsel %vm93, %v25, 0
  %v113 = vsel %vm93, %v26, 0
  %v116 = vsel %vm93, %v27, 0
  %v119 = vsel %vm93, %v28, 0
  %v122 = vsel %vm93, %v29, 0
  %v125 = vsel %vm93, %v30, 0
  %v128 = vsel %vm93, %v31, 0
  %v131 = vsel %vm93, %v32, 0
  %v134 = vsel %vm93, %v33, 0
  %v137 = vsel %vm93, %v34, 0
  %v140 = vsel %vm93, %v35, 0
  %v143 = vsel %vm93, %v36, 0
  %v146 = vsel %vm93, %v37, 0
  %v149 = vsel %vm93, %v38, 0
  %v152 = vsel %vm93, %v39, 0
  %v155 = vsel %vm93, %v40, 0
  %v158 = vsel %vm93, %v41, 0
  %v161 = vsel %vm93, %v42, 0
  %v164 = vsel %vm93, %v43, 0
  %v167 = vsel %vm93, %v44, 0
  %v170 = vsel %vm93, %v45, 0
  %v173 = vsel %vm93, %v46, 0
  %v176 = vsel %vm93, %v47, 0
  %v179 = vsel %vm93, %v48, 0
  %v182 = vsel %vm93, %v49, 0
  %v185 = vsel %vm93, %v50, 0
  %v188 = vsel %vm93, %v51, 0
  %v191 = vsel %vm93, %v52, 0
  %v194 = vsel %vm93, %v53, 0
  %v197 = vsel %vm93, %v54, 0
  %v200 = vsel %vm93, %v55, 0
  %v203 = vsel %vm93, %v56, 0
  %v206 = vsel %vm93, %v57, 0
  %v209 = vsel %vm93, %v58, 0
  %v212 = vsel %vm93, %v59, 0
  %v215 = vsel %vm93, %v60, 0
  %v218 = vsel %vm93, %v61, 0
  %v221 = vsel %vm93, %v62, 0
  %v224 = vsel %vm93, %v63, 0
  %v227 = vsel %vm93, %v64, 0
  %v230 = vsel %vm93, %v65, 0
  %v233 = vsel %vm93, %v66, 0
  %v236 = vsel %vm93, %v67, 0
  %v239 = vsel %vm93, %v68, 0
  %v242 = vsel %vm93, %v69, 0
  %v245 = vsel %vm93, %v70, 0
  %v248 = vsel %vm93, %v71, 0
  %v251 = vsel %vm93, %v72, 0
  %v254 = vsel %vm93, %v73, 0
  %v257 = vsel %vm93, %v74, 0
  %v260 = vsel %vm93, %v75, 0
  %v263 = vsel %vm93, %v76, 0
  %v266 = vsel %vm93, %v77, 0
  %v269 = vsel %vm93, %v78, 0
  %v272 = vsel %vm93, %v79, 0
  %v275 = vsel %vm93, %v80, 0
  %v278 = vsel %vm93, %v81, 0
  %v281 = vsel %vm93, %v82, 0
  %v284 = vsel %vm93, %v83, 0
  %286 = vmatprep.subr.mxu0 0.0
  %287 = vmatpush1.msra.mxu0 %v84
  %288 = vmatprep.subr.mxu0 0.0
  %289 = vmatpush1.msra.mxu0 %v85
  %290 = vmatprep.subr.mxu0 0.0
  %291 = vmatpush1.msra.mxu0 0.0
  %292 = vmatprep.subr.mxu0 0.0
  %293 = vmatpush1.msra.mxu0 0.0
  %294 = vmatprep.subr.mxu0 0.0
  %295 = vmatpush1.msra.mxu0 0.0
  %296 = vmatprep.subr.mxu0 0.0
  %297 = vmatpush1.msra.mxu0 0.0
  %298 = vmatprep.subr.mxu0 0.0
  %299 = vmatpush1.msra.mxu0 0.0
  %300 = vmatprep.subr.mxu0 0.0
  %301 = vmatpush1.msra.mxu0 0.0
  %302 = vmatprep.subr.mxu0 0.0
  %303 = vmatpush1.msra.mxu0 0.0
  %304 = vmatprep.subr.mxu0 0.0
  %305 = vmatpush1.msra.mxu0 0.0
  %306 = vmatprep.subr.mxu0 0.0
  %307 = vmatpush1.msra.mxu0 0.0
  %308 = vmatprep.subr.mxu0 0.0
  %309 = vmatpush1.msra.mxu0 0.0
  %310 = vmatprep.subr.mxu0 0.0
  %311 = vmatpush1.msra.mxu0 0.0
  %312 = vmatprep.subr.mxu0 0.0
  %313 = vmatpush1.msra.mxu0 0.0
  %314 = vmatprep.subr.mxu0 0.0
  %315 = vmatpush1.msra.mxu0 0.0
  %316 = vmatprep.subr.mxu0 0.0
  %317 = vmatpush1.msra.mxu0 0.0
  %318 = vmatprep.subr.mxu0 0.0
  %319 = vmatpush1.msra.mxu0 0.0
  %320 = vmatprep.subr.mxu0 0.0
  %321 = vmatpush1.msra.mxu0 0.0
  %322 = vmatprep.subr.mxu0 0.0
  %323 = vmatpush1.msra.mxu0 0.0
  %324 = vmatprep.subr.mxu0 0.0
  %325 = vmatpush1.msra.mxu0 0.0
  %326 = vmatprep.subr.mxu0 0.0
  %327 = vmatpush1.msra.mxu0 0.0
  %328 = vmatprep.subr.mxu0 0.0
  %329 = vmatpush1.msra.mxu0 0.0
  %330 = vmatprep.subr.mxu0 0.0
  %331 = vmatpush1.msra.mxu0 0.0
  %332 = vmatprep.subr.mxu0 0.0
  %333 = vmatpush1.msra.mxu0 0.0
  %334 = vmatprep.subr.mxu0 0.0
  %335 = vmatpush1.msra.mxu0 0.0
  %336 = vmatprep.subr.mxu0 0.0
  %337 = vmatpush1.msra.mxu0 0.0
  %338 = vmatprep.subr.mxu0 0.0
  %339 = vmatpush1.msra.mxu0 0.0
  %340 = vmatprep.subr.mxu0 0.0
  %341 = vmatpush1.msra.mxu0 0.0
  %342 = vmatprep.subr.mxu0 0.0
  %343 = vmatpush1.msra.mxu0 0.0
  %344 = vmatprep.subr.mxu0 0.0
  %345 = vmatpush1.msra.mxu0 0.0
  %346 = vmatprep.subr.mxu0 0.0
  %347 = vmatpush1.msra.mxu0 0.0
  %348 = vmatprep.subr.mxu0 0.0
  %349 = vmatpush1.msra.mxu0 0.0
  %350 = vmatprep.mubr.f32.mxu0 0.0
  %351 = vmatmul.mubr.f32.gmra.mrb[0].mxu0 %v95
  %v352 = vpop.f32.mrb[0].mxu0
  %v353 = vadd.f32 %v91, %v352
  %v354 = vpop.f32.mrb[0].mxu0
  %355 = vmatprep.mubr.f32.mxu0 0.0
  %356 = vmatmul.mubr.f32.gmra.mrb[0].mxu0 %v98
  %v357 = vpop.f32.mrb[0].mxu0
  %v358 = vadd.f32 %v91, %v357
  %v359 = vpop.f32.mrb[0].mxu0
  %360 = vmatprep.mubr.f32.mxu0 0.0
  %361 = vmatmul.mubr.f32.gmra.mrb[0].mxu0 %v101
  %v362 = vpop.f32.mrb[0].mxu0
  %v363 = vadd.f32 %v91, %v362
  %v364 = vpop.f32.mrb[0].mxu0
  %365 = vmatprep.mubr.f32.mxu0 0.0
  %366 = vmatmul.mubr.f32.gmra.mrb[0].mxu0 %v104
  %v367 = vpop.f32.mrb[0].mxu0
  %v368 = vadd.f32 %v91, %v367
  %v369 = vpop.f32.mrb[0].mxu0
  %370 = vmatprep.mubr.f32.mxu0 0.0
  %371 = vmatmul.mubr.f32.gmra.mrb[0].mxu0 %v107
  %v372 = vpop.f32.mrb[0].mxu0
  %v373 = vadd.f32 %v91, %v372
  %v374 = vpop.f32.mrb[0].mxu0
  %375 = vmatprep.mubr.f32.mxu0 0.0
  %376 = vmatmul.mubr.f32.gmra.mrb[0].mxu0 %v110
  %v377 = vpop.f32.mrb[0].mxu0
  %v378 = vadd.f32 %v91, %v377
  %v379 = vpop.f32.mrb[0].mxu0
  %380 = vmatprep.mubr.f32.mxu0 0.0
  %381 = vmatmul.mubr.f32.gmra.mrb[0].mxu0 %v113
  %v382 = vpop.f32.mrb[0].mxu0
  %v383 = vadd.f32 %v91, %v382
  %v384 = vpop.f32.mrb[0].mxu0
  %385 = vmatprep.mubr.f32.mxu0 0.0
  %386 = vmatmul.mubr.f32.gmra.mrb[0].mxu0 %v116
  %v387 = vpop.f32.mrb[0].mxu0
  %v388 = vadd.f32 %v91, %v387
  %v389 = vpop.f32.mrb[0].mxu0
  %390 = vmatprep.mubr.f32.mxu0 0.0
  %391 = vmatmul.mubr.f32.gmra.mrb[0].mxu0 %v119
  %v392 = vpop.f32.mrb[0].mxu0
  %v393 = vadd.f32 %v91, %v392
  %v394 = vpop.f32.mrb[0].mxu0
  %395 = vmatprep.mubr.f32.mxu0 0.0
  %396 = vmatmul.mubr.f32.gmra.mrb[0].mxu0 %v122
  %v397 = vpop.f32.mrb[0].mxu0
  %v398 = vadd.f32 %v91, %v397
  %v399 = vpop.f32.mrb[0].mxu0
  %400 = vmatprep.mubr.f32.mxu0 0.0
  %401 = vmatmul.mubr.f32.gmra.mrb[0].mxu0 %v125
  %v402 = vpop.f32.mrb[0].mxu0
  %v403 = vadd.f32 %v91, %v402
  %v404 = vpop.f32.mrb[0].mxu0
  %405 = vmatprep.mubr.f32.mxu0 0.0
  %406 = vmatmul.mubr.f32.gmra.mrb[0].mxu0 %v128
  %v407 = vpop.f32.mrb[0].mxu0
  %v408 = vadd.f32 %v91, %v407
  %v409 = vpop.f32.mrb[0].mxu0
  %410 = vmatprep.mubr.f32.mxu0 0.0
  %411 = vmatmul.mubr.f32.gmra.mrb[0].mxu0 %v131
  %v412 = vpop.f32.mrb[0].mxu0
  %v413 = vadd.f32 %v91, %v412
  %v414 = vpop.f32.mrb[0].mxu0
  %415 = vmatprep.mubr.f32.mxu0 0.0
  %416 = vmatmul.mubr.f32.gmra.mrb[0].mxu0 %v134
  %v417 = vpop.f32.mrb[0].mxu0
  %v418 = vadd.f32 %v91, %v417
  %v419 = vpop.f32.mrb[0].mxu0
  %420 = vmatprep.mubr.f32.mxu0 0.0
  %421 = vmatmul.mubr.f32.gmra.mrb[0].mxu0 %v137
  %v422 = vpop.f32.mrb[0].mxu0
  %v423 = vadd.f32 %v91, %v422
  %v424 = vpop.f32.mrb[0].mxu0
  %425 = vmatprep.mubr.f32.mxu0 0.0
  %426 = vmatmul.mubr.f32.gmra.mrb[0].mxu0 %v140
  %v427 = vpop.f32.mrb[0].mxu0
  %v428 = vadd.f32 %v91, %v427
  %v429 = vpop.f32.mrb[0].mxu0
  %430 = vmatprep.mubr.f32.mxu0 0.0
  %431 = vmatmul.mubr.f32.gmra.mrb[0].mxu0 %v143
  %v432 = vpop.f32.mrb[0].mxu0
  %v433 = vadd.f32 %v91, %v432
  %v434 = vpop.f32.mrb[0].mxu0
  %435 = vmatprep.mubr.f32.mxu0 0.0
  %436 = vmatmul.mubr.f32.gmra.mrb[0].mxu0 %v146
  %v437 = vpop.f32.mrb[0].mxu0
  %v438 = vadd.f32 %v91, %v437
  %v439 = vpop.f32.mrb[0].mxu0
  %440 = vmatprep.mubr.f32.mxu0 0.0
  %441 = vmatmul.mubr.f32.gmra.mrb[0].mxu0 %v149
  %v442 = vpop.f32.mrb[0].mxu0
  %v443 = vadd.f32 %v91, %v442
  %v444 = vpop.f32.mrb[0].mxu0
  %445 = vmatprep.mubr.f32.mxu0 0.0
  %446 = vmatmul.mubr.f32.gmra.mrb[0].mxu0 %v152
  %v447 = vpop.f32.mrb[0].mxu0
  %v448 = vadd.f32 %v91, %v447
  %v449 = vpop.f32.mrb[0].mxu0
  %450 = vmatprep.mubr.f32.mxu0 0.0
  %451 = vmatmul.mubr.f32.gmra.mrb[0].mxu0 %v155
  %v452 = vpop.f32.mrb[0].mxu0
  %v453 = vadd.f32 %v91, %v452
  %v454 = vpop.f32.mrb[0].mxu0
  %455 = vmatprep.mubr.f32.mxu0 0.0
  %456 = vmatmul.mubr.f32.gmra.mrb[0].mxu0 %v158
  %v457 = vpop.f32.mrb[0].mxu0
  %v458 = vadd.f32 %v91, %v457
  %v459 = vpop.f32.mrb[0].mxu0
  %460 = vmatprep.mubr.f32.mxu0 0.0
  %461 = vmatmul.mubr.f32.gmra.mrb[0].mxu0 %v161
  %v462 = vpop.f32.mrb[0].mxu0
  %v463 = vadd.f32 %v91, %v462
  %v464 = vpop.f32.mrb[0].mxu0
  %465 = vmatprep.mubr.f32.mxu0 0.0
  %466 = vmatmul.mubr.f32.gmra.mrb[0].mxu0 %v164
  %v467 = vpop.f32.mrb[0].mxu0
  %v468 = vadd.f32 %v91, %v467
  %v469 = vpop.f32.mrb[0].mxu0
  %470 = vmatprep.mubr.f32.mxu0 0.0
  %471 = vmatmul.mubr.f32.gmra.mrb[0].mxu0 %v167
  %v472 = vpop.f32.mrb[0].mxu0
  %v473 = vadd.f32 %v91, %v472
  %v474 = vpop.f32.mrb[0].mxu0
  %475 = vmatprep.mubr.f32.mxu0 0.0
  %476 = vmatmul.mubr.f32.gmra.mrb[0].mxu0 %v170
  %v477 = vpop.f32.mrb[0].mxu0
  %v478 = vadd.f32 %v91, %v477
  %v479 = vpop.f32.mrb[0].mxu0
  %480 = vmatprep.mubr.f32.mxu0 0.0
  %481 = vmatmul.mubr.f32.gmra.mrb[0].mxu0 %v173
  %v482 = vpop.f32.mrb[0].mxu0
  %v483 = vadd.f32 %v91, %v482
  %v484 = vpop.f32.mrb[0].mxu0
  %485 = vmatprep.mubr.f32.mxu0 0.0
  %486 = vmatmul.mubr.f32.gmra.mrb[0].mxu0 %v176
  %v487 = vpop.f32.mrb[0].mxu0
  %v488 = vadd.f32 %v91, %v487
  %v489 = vpop.f32.mrb[0].mxu0
  %490 = vmatprep.mubr.f32.mxu0 0.0
  %491 = vmatmul.mubr.f32.gmra.mrb[0].mxu0 %v179
  %v492 = vpop.f32.mrb[0].mxu0
  %v493 = vadd.f32 %v91, %v492
  %v494 = vpop.f32.mrb[0].mxu0
  %495 = vmatprep.mubr.f32.mxu0 0.0
  %496 = vmatmul.mubr.f32.gmra.mrb[0].mxu0 %v182
  %v497 = vpop.f32.mrb[0].mxu0
  %v498 = vadd.f32 %v91, %v497
  %v499 = vpop.f32.mrb[0].mxu0
  %500 = vmatprep.mubr.f32.mxu0 0.0
  %501 = vmatmul.mubr.f32.gmra.mrb[0].mxu0 %v185
  %v502 = vpop.f32.mrb[0].mxu0
  %v503 = vadd.f32 %v91, %v502
  %v504 = vpop.f32.mrb[0].mxu0
  %505 = vmatprep.mubr.f32.mxu0 0.0
  %506 = vmatmul.mubr.f32.gmra.mrb[0].mxu0 %v188
  %v507 = vpop.f32.mrb[0].mxu0
  %v508 = vadd.f32 %v91, %v507
  %v509 = vpop.f32.mrb[0].mxu0
  %510 = vmatprep.mubr.f32.mxu0 0.0
  %511 = vmatmul.mubr.f32.gmra.mrb[0].mxu0 %v191
  %v512 = vpop.f32.mrb[0].mxu0
  %v513 = vadd.f32 %v91, %v512
  %v514 = vpop.f32.mrb[0].mxu0
  %515 = vmatprep.mubr.f32.mxu0 0.0
  %516 = vmatmul.mubr.f32.gmra.mrb[0].mxu0 %v194
  %v517 = vpop.f32.mrb[0].mxu0
  %v518 = vadd.f32 %v91, %v517
  %v519 = vpop.f32.mrb[0].mxu0
  %520 = vmatprep.mubr.f32.mxu0 0.0
  %521 = vmatmul.mubr.f32.gmra.mrb[0].mxu0 %v197
  %v522 = vpop.f32.mrb[0].mxu0
  %v523 = vadd.f32 %v91, %v522
  %v524 = vpop.f32.mrb[0].mxu0
  %525 = vmatprep.mubr.f32.mxu0 0.0
  %526 = vmatmul.mubr.f32.gmra.mrb[0].mxu0 %v200
  %v527 = vpop.f32.mrb[0].mxu0
  %v528 = vadd.f32 %v91, %v527
  %v529 = vpop.f32.mrb[0].mxu0
  %530 = vmatprep.mubr.f32.mxu0 0.0
  %531 = vmatmul.mubr.f32.gmra.mrb[0].mxu0 %v203
  %v532 = vpop.f32.mrb[0].mxu0
  %v533 = vadd.f32 %v91, %v532
  %v534 = vpop.f32.mrb[0].mxu0
  %535 = vmatprep.mubr.f32.mxu0 0.0
  %536 = vmatmul.mubr.f32.gmra.mrb[0].mxu0 %v206
  %v537 = vpop.f32.mrb[0].mxu0
  %v538 = vadd.f32 %v91, %v537
  %v539 = vpop.f32.mrb[0].mxu0
  %540 = vmatprep.mubr.f32.mxu0 0.0
  %541 = vmatmul.mubr.f32.gmra.mrb[0].mxu0 %v209
  %v542 = vpop.f32.mrb[0].mxu0
  %v543 = vadd.f32 %v91, %v542
  %v544 = vpop.f32.mrb[0].mxu0
  %545 = vmatprep.mubr.f32.mxu0 0.0
  %546 = vmatmul.mubr.f32.gmra.mrb[0].mxu0 %v212
  %v547 = vpop.f32.mrb[0].mxu0
  %v548 = vadd.f32 %v91, %v547
  %v549 = vpop.f32.mrb[0].mxu0
  %550 = vmatprep.mubr.f32.mxu0 0.0
  %551 = vmatmul.mubr.f32.gmra.mrb[0].mxu0 %v215
  %v552 = vpop.f32.mrb[0].mxu0
  %v553 = vadd.f32 %v91, %v552
  %v554 = vpop.f32.mrb[0].mxu0
  %555 = vmatprep.mubr.f32.mxu0 0.0
  %556 = vmatmul.mubr.f32.gmra.mrb[0].mxu0 %v218
  %v557 = vpop.f32.mrb[0].mxu0
  %v558 = vadd.f32 %v91, %v557
  %v559 = vpop.f32.mrb[0].mxu0
  %560 = vmatprep.mubr.f32.mxu0 0.0
  %561 = vmatmul.mubr.f32.gmra.mrb[0].mxu0 %v221
  %v562 = vpop.f32.mrb[0].mxu0
  %v563 = vadd.f32 %v91, %v562
  %v564 = vpop.f32.mrb[0].mxu0
  %565 = vmatprep.mubr.f32.mxu0 0.0
  %566 = vmatmul.mubr.f32.gmra.mrb[0].mxu0 %v224
  %v567 = vpop.f32.mrb[0].mxu0
  %v568 = vadd.f32 %v91, %v567
  %v569 = vpop.f32.mrb[0].mxu0
  %570 = vmatprep.mubr.f32.mxu0 0.0
  %571 = vmatmul.mubr.f32.gmra.mrb[0].mxu0 %v227
  %v572 = vpop.f32.mrb[0].mxu0
  %v573 = vadd.f32 %v91, %v572
  %v574 = vpop.f32.mrb[0].mxu0
  %575 = vmatprep.mubr.f32.mxu0 0.0
  %576 = vmatmul.mubr.f32.gmra.mrb[0].mxu0 %v230
  %v577 = vpop.f32.mrb[0].mxu0
  %v578 = vadd.f32 %v91, %v577
  %v579 = vpop.f32.mrb[0].mxu0
  %580 = vmatprep.mubr.f32.mxu0 0.0
  %581 = vmatmul.mubr.f32.gmra.mrb[0].mxu0 %v233
  %v582 = vpop.f32.mrb[0].mxu0
  %v583 = vadd.f32 %v91, %v582
  %v584 = vpop.f32.mrb[0].mxu0
  %585 = vmatprep.mubr.f32.mxu0 0.0
  %586 = vmatmul.mubr.f32.gmra.mrb[0].mxu0 %v236
  %v587 = vpop.f32.mrb[0].mxu0
  %v588 = vadd.f32 %v91, %v587
  %v589 = vpop.f32.mrb[0].mxu0
  %590 = vmatprep.mubr.f32.mxu0 0.0
  %591 = vmatmul.mubr.f32.gmra.mrb[0].mxu0 %v239
  %v592 = vpop.f32.mrb[0].mxu0
  %v593 = vadd.f32 %v91, %v592
  %v594 = vpop.f32.mrb[0].mxu0
  %595 = vmatprep.mubr.f32.mxu0 0.0
  %596 = vmatmul.mubr.f32.gmra.mrb[0].mxu0 %v242
  %v597 = vpop.f32.mrb[0].mxu0
  %v598 = vadd.f32 %v91, %v597
  %v599 = vpop.f32.mrb[0].mxu0
  %600 = vmatprep.mubr.f32.mxu0 0.0
  %601 = vmatmul.mubr.f32.gmra.mrb[0].mxu0 %v245
  %v602 = vpop.f32.mrb[0].mxu0
  %v603 = vadd.f32 %v91, %v602
  %v604 = vpop.f32.mrb[0].mxu0
  %605 = vmatprep.mubr.f32.mxu0 0.0
  %606 = vmatmul.mubr.f32.gmra.mrb[0].mxu0 %v248
  %v607 = vpop.f32.mrb[0].mxu0
  %v608 = vadd.f32 %v91, %v607
  %v609 = vpop.f32.mrb[0].mxu0
  %610 = vmatprep.mubr.f32.mxu0 0.0
  %611 = vmatmul.mubr.f32.gmra.mrb[0].mxu0 %v251
  %v612 = vpop.f32.mrb[0].mxu0
  %v613 = vadd.f32 %v91, %v612
  %v614 = vpop.f32.mrb[0].mxu0
  %615 = vmatprep.mubr.f32.mxu0 0.0
  %616 = vmatmul.mubr.f32.gmra.mrb[0].mxu0 %v254
  %v617 = vpop.f32.mrb[0].mxu0
  %v618 = vadd.f32 %v91, %v617
  %v619 = vpop.f32.mrb[0].mxu0
  %620 = vmatprep.mubr.f32.mxu0 0.0
  %621 = vmatmul.mubr.f32.gmra.mrb[0].mxu0 %v257
  %v622 = vpop.f32.mrb[0].mxu0
  %v623 = vadd.f32 %v91, %v622
  %v624 = vpop.f32.mrb[0].mxu0
  %625 = vmatprep.mubr.f32.mxu0 0.0
  %626 = vmatmul.mubr.f32.gmra.mrb[0].mxu0 %v260
  %v627 = vpop.f32.mrb[0].mxu0
  %v628 = vadd.f32 %v91, %v627
  %v629 = vpop.f32.mrb[0].mxu0
  %630 = vmatprep.mubr.f32.mxu0 0.0
  %631 = vmatmul.mubr.f32.gmra.mrb[0].mxu0 %v263
  %v632 = vpop.f32.mrb[0].mxu0
  %v633 = vadd.f32 %v91, %v632
  %v634 = vpop.f32.mrb[0].mxu0
  %635 = vmatprep.mubr.f32.mxu0 0.0
  %636 = vmatmul.mubr.f32.gmra.mrb[0].mxu0 %v266
  %v637 = vpop.f32.mrb[0].mxu0
  %v638 = vadd.f32 %v91, %v637
  %v639 = vpop.f32.mrb[0].mxu0
  %640 = vmatprep.mubr.f32.mxu0 0.0
  %641 = vmatmul.mubr.f32.gmra.mrb[0].mxu0 %v269
  %v642 = vpop.f32.mrb[0].mxu0
  %v643 = vadd.f32 %v91, %v642
  %v644 = vpop.f32.mrb[0].mxu0
  %645 = vmatprep.mubr.f32.mxu0 0.0
  %646 = vmatmul.mubr.f32.gmra.mrb[0].mxu0 %v272
  %v647 = vpop.f32.mrb[0].mxu0
  %v648 = vadd.f32 %v91, %v647
  %v649 = vpop.f32.mrb[0].mxu0
  %650 = vmatprep.mubr.f32.mxu0 0.0
  %651 = vmatmul.mubr.f32.gmra.mrb[0].mxu0 %v275
  %v652 = vpop.f32.mrb[0].mxu0
  %v653 = vadd.f32 %v91, %v652
  %v654 = vpop.f32.mrb[0].mxu0
  %655 = vmatprep.mubr.f32.mxu0 0.0
  %656 = vmatmul.mubr.f32.gmra.mrb[0].mxu0 %v278
  %v657 = vpop.f32.mrb[0].mxu0
  %v658 = vadd.f32 %v91, %v657
  %v659 = vpop.f32.mrb[0].mxu0
  %660 = vmatprep.mubr.f32.mxu0 0.0
  %661 = vmatmul.mubr.f32.gmra.mrb[0].mxu0 %v281
  %v662 = vpop.f32.mrb[0].mxu0
  %v663 = vadd.f32 %v91, %v662
  %v664 = vpop.f32.mrb[0].mxu0
  %665 = vmatprep.mubr.f32.mxu0 0.0
  %666 = vmatmul.mubr.f32.gmra.mrb[0].mxu0 %v284
  %v667 = vpop.f32.mrb[0].mxu0
  %v668 = vadd.f32 %v91, %v667
  %v669 = vpop.f32.mrb[0].mxu0
  %670 = vdwg.mxu0
  %v671 = vxor.u32 %v353, 2147483648
  %v672 = vxor.u32 %v358, 2147483648
  %v673 = vxor.u32 %v363, 2147483648
  %v674 = vxor.u32 %v368, 2147483648
  %v675 = vxor.u32 %v373, 2147483648
  %v676 = vxor.u32 %v378, 2147483648
  %v677 = vxor.u32 %v383, 2147483648
  %v678 = vxor.u32 %v388, 2147483648
  %v679 = vxor.u32 %v393, 2147483648
  %v680 = vxor.u32 %v398, 2147483648
  %v681 = vxor.u32 %v403, 2147483648
  %v682 = vxor.u32 %v408, 2147483648
  %v683 = vxor.u32 %v413, 2147483648
  %v684 = vxor.u32 %v418, 2147483648
  %v685 = vxor.u32 %v423, 2147483648
  %v686 = vxor.u32 %v428, 2147483648
  %v687 = vxor.u32 %v433, 2147483648
  %v688 = vxor.u32 %v438, 2147483648
  %v689 = vxor.u32 %v443, 2147483648
  %v690 = vxor.u32 %v448, 2147483648
  %v691 = vxor.u32 %v453, 2147483648
  %v692 = vxor.u32 %v458, 2147483648
  %v693 = vxor.u32 %v463, 2147483648
  %v694 = vxor.u32 %v468, 2147483648
  %v695 = vxor.u32 %v473, 2147483648
  %v696 = vxor.u32 %v478, 2147483648
  %v697 = vxor.u32 %v483, 2147483648
  %v698 = vxor.u32 %v488, 2147483648
  %v699 = vxor.u32 %v493, 2147483648
  %v700 = vxor.u32 %v498, 2147483648
  %v701 = vxor.u32 %v503, 2147483648
  %v702 = vxor.u32 %v508, 2147483648
  %v703 = vxor.u32 %v513, 2147483648
  %v704 = vxor.u32 %v518, 2147483648
  %v705 = vxor.u32 %v523, 2147483648
  %v706 = vxor.u32 %v528, 2147483648
  %v707 = vxor.u32 %v533, 2147483648
  %v708 = vxor.u32 %v538, 2147483648
  %v709 = vxor.u32 %v543, 2147483648
  %v710 = vxor.u32 %v548, 2147483648
  %v711 = vxor.u32 %v553, 2147483648
  %v712 = vxor.u32 %v558, 2147483648
  %v713 = vxor.u32 %v563, 2147483648
  %v714 = vxor.u32 %v568, 2147483648
  %v715 = vxor.u32 %v573, 2147483648
  %v716 = vxor.u32 %v578, 2147483648
  %v717 = vxor.u32 %v583, 2147483648
  %v718 = vxor.u32 %v588, 2147483648
  %v719 = vxor.u32 %v593, 2147483648
  %v720 = vxor.u32 %v598, 2147483648
  %v721 = vxor.u32 %v603, 2147483648
  %v722 = vxor.u32 %v608, 2147483648
  %v723 = vxor.u32 %v613, 2147483648
  %v724 = vxor.u32 %v618, 2147483648
  %v725 = vxor.u32 %v623, 2147483648
  %v726 = vxor.u32 %v628, 2147483648
  %v727 = vxor.u32 %v633, 2147483648
  %v728 = vxor.u32 %v638, 2147483648
  %v729 = vxor.u32 %v643, 2147483648
  %v730 = vxor.u32 %v648, 2147483648
  %v731 = vxor.u32 %v653, 2147483648
  %v732 = vxor.u32 %v658, 2147483648
  %v733 = vxor.u32 %v663, 2147483648
  %v734 = vxor.u32 %v668, 2147483648
  %v735 = vmul.f32 %v671, 1.442695
  %v736 = vpow.pop %v735
  %v737 = vmul.f32 %v672, 1.442695
  %v738 = vpow.pop %v737
  %v739 = vmul.f32 %v673, 1.442695
  %v740 = vpow.pop %v739
  %v741 = vmul.f32 %v674, 1.442695
  %v742 = vpow.pop %v741
  %v743 = vmul.f32 %v675, 1.442695
  %v744 = vpow.pop %v743
  %v745 = vmul.f32 %v676, 1.442695
  %v746 = vpow.pop %v745
  %v747 = vmul.f32 %v677, 1.442695
  %v748 = vpow.pop %v747
  %v749 = vmul.f32 %v678, 1.442695
  %v750 = vpow.pop %v749
  %v751 = vmul.f32 %v679, 1.442695
  %v752 = vpow.pop %v751
  %v753 = vmul.f32 %v680, 1.442695
  %v754 = vpow.pop %v753
  %v755 = vmul.f32 %v681, 1.442695
  %v756 = vpow.pop %v755
  %v757 = vmul.f32 %v682, 1.442695
  %v758 = vpow.pop %v757
  %v759 = vmul.f32 %v683, 1.442695
  %v760 = vpow.pop %v759
  %v761 = vmul.f32 %v684, 1.442695
  %v762 = vpow.pop %v761
  %v763 = vmul.f32 %v685, 1.442695
  %v764 = vpow.pop %v763
  %v765 = vmul.f32 %v686, 1.442695
  %v766 = vpow.pop %v765
  %v767 = vmul.f32 %v687, 1.442695
  %v768 = vpow.pop %v767
  %v769 = vmul.f32 %v688, 1.442695
  %v770 = vpow.pop %v769
  %v771 = vmul.f32 %v689, 1.442695
  %v772 = vpow.pop %v771
  %v773 = vmul.f32 %v690, 1.442695
  %v774 = vpow.pop %v773
  %v775 = vmul.f32 %v691, 1.442695
  %v776 = vpow.pop %v775
  %v777 = vmul.f32 %v692, 1.442695
  %v778 = vpow.pop %v777
  %v779 = vmul.f32 %v693, 1.442695
  %v780 = vpow.pop %v779
  %v781 = vmul.f32 %v694, 1.442695
  %v782 = vpow.pop %v781
  %v783 = vmul.f32 %v695, 1.442695
  %v784 = vpow.pop %v783
  %v785 = vmul.f32 %v696, 1.442695
  %v786 = vpow.pop %v785
  %v787 = vmul.f32 %v697, 1.442695
  %v788 = vpow.pop %v787
  %v789 = vmul.f32 %v698, 1.442695
  %v790 = vpow.pop %v789
  %v791 = vmul.f32 %v699, 1.442695
  %v792 = vpow.pop %v791
  %v793 = vmul.f32 %v700, 1.442695
  %v794 = vpow.pop %v793
  %v795 = vmul.f32 %v701, 1.442695
  %v796 = vpow.pop %v795
  %v797 = vmul.f32 %v702, 1.442695
  %v798 = vpow.pop %v797
  %v799 = vmul.f32 %v703, 1.442695
  %v800 = vpow.pop %v799
  %v801 = vmul.f32 %v704, 1.442695
  %v802 = vpow.pop %v801
  %v803 = vmul.f32 %v705, 1.442695
  %v804 = vpow.pop %v803
  %v805 = vmul.f32 %v706, 1.442695
  %v806 = vpow.pop %v805
  %v807 = vmul.f32 %v707, 1.442695
  %v808 = vpow.pop %v807
  %v809 = vmul.f32 %v708, 1.442695
  %v810 = vpow.pop %v809
  %v811 = vmul.f32 %v709, 1.442695
  %v812 = vpow.pop %v811
  %v813 = vmul.f32 %v710, 1.442695
  %v814 = vpow.pop %v813
  %v815 = vmul.f32 %v711, 1.442695
  %v816 = vpow.pop %v815
  %v817 = vmul.f32 %v712, 1.442695
  %v818 = vpow.pop %v817
  %v819 = vmul.f32 %v713, 1.442695
  %v820 = vpow.pop %v819
  %v821 = vmul.f32 %v714, 1.442695
  %v822 = vpow.pop %v821
  %v823 = vmul.f32 %v715, 1.442695
  %v824 = vpow.pop %v823
  %v825 = vmul.f32 %v716, 1.442695
  %v826 = vpow.pop %v825
  %v827 = vmul.f32 %v717, 1.442695
  %v828 = vpow.pop %v827
  %v829 = vmul.f32 %v718, 1.442695
  %v830 = vpow.pop %v829
  %v831 = vmul.f32 %v719, 1.442695
  %v832 = vpow.pop %v831
  %v833 = vmul.f32 %v720, 1.442695
  %v834 = vpow.pop %v833
  %v835 = vmul.f32 %v721, 1.442695
  %v836 = vpow.pop %v835
  %v837 = vmul.f32 %v722, 1.442695
  %v838 = vpow.pop %v837
  %v839 = vmul.f32 %v723, 1.442695
  %v840 = vpow.pop %v839
  %v841 = vmul.f32 %v724, 1.442695
  %v842 = vpow.pop %v841
  %v843 = vmul.f32 %v725, 1.442695
  %v844 = vpow.pop %v843
  %v845 = vmul.f32 %v726, 1.442695
  %v846 = vpow.pop %v845
  %v847 = vmul.f32 %v727, 1.442695
  %v848 = vpow.pop %v847
  %v849 = vmul.f32 %v728, 1.442695
  %v850 = vpow.pop %v849
  %v851 = vmul.f32 %v729, 1.442695
  %v852 = vpow.pop %v851
  %v853 = vmul.f32 %v730, 1.442695
  %v854 = vpow.pop %v853
  %v855 = vmul.f32 %v731, 1.442695
  %v856 = vpow.pop %v855
  %v857 = vmul.f32 %v732, 1.442695
  %v858 = vpow.pop %v857
  %v859 = vmul.f32 %v733, 1.442695
  %v860 = vpow.pop %v859
  %v861 = vmul.f32 %v734, 1.442695
  %v862 = vpow.pop %v861
  %v863 = vadd.f32 %v736, 1.0
  %v864 = vadd.f32 %v738, 1.0
  %v865 = vadd.f32 %v740, 1.0
  %v866 = vadd.f32 %v742, 1.0
  %v867 = vadd.f32 %v744, 1.0
  %v868 = vadd.f32 %v746, 1.0
  %v869 = vadd.f32 %v748, 1.0
  %v870 = vadd.f32 %v750, 1.0
  %v871 = vadd.f32 %v752, 1.0
  %v872 = vadd.f32 %v754, 1.0
  %v873 = vadd.f32 %v756, 1.0
  %v874 = vadd.f32 %v758, 1.0
  %v875 = vadd.f32 %v760, 1.0
  %v876 = vadd.f32 %v762, 1.0
  %v877 = vadd.f32 %v764, 1.0
  %v878 = vadd.f32 %v766, 1.0
  %v879 = vadd.f32 %v768, 1.0
  %v880 = vadd.f32 %v770, 1.0
  %v881 = vadd.f32 %v772, 1.0
  %v882 = vadd.f32 %v774, 1.0
  %v883 = vadd.f32 %v776, 1.0
  %v884 = vadd.f32 %v778, 1.0
  %v885 = vadd.f32 %v780, 1.0
  %v886 = vadd.f32 %v782, 1.0
  %v887 = vadd.f32 %v784, 1.0
  %v888 = vadd.f32 %v786, 1.0
  %v889 = vadd.f32 %v788, 1.0
  %v890 = vadd.f32 %v790, 1.0
  %v891 = vadd.f32 %v792, 1.0
  %v892 = vadd.f32 %v794, 1.0
  %v893 = vadd.f32 %v796, 1.0
  %v894 = vadd.f32 %v798, 1.0
  %v895 = vadd.f32 %v800, 1.0
  %v896 = vadd.f32 %v802, 1.0
  %v897 = vadd.f32 %v804, 1.0
  %v898 = vadd.f32 %v806, 1.0
  %v899 = vadd.f32 %v808, 1.0
  %v900 = vadd.f32 %v810, 1.0
  %v901 = vadd.f32 %v812, 1.0
  %v902 = vadd.f32 %v814, 1.0
  %v903 = vadd.f32 %v816, 1.0
  %v904 = vadd.f32 %v818, 1.0
  %v905 = vadd.f32 %v820, 1.0
  %v906 = vadd.f32 %v822, 1.0
  %v907 = vadd.f32 %v824, 1.0
  %v908 = vadd.f32 %v826, 1.0
  %v909 = vadd.f32 %v828, 1.0
  %v910 = vadd.f32 %v830, 1.0
  %v911 = vadd.f32 %v832, 1.0
  %v912 = vadd.f32 %v834, 1.0
  %v913 = vadd.f32 %v836, 1.0
  %v914 = vadd.f32 %v838, 1.0
  %v915 = vadd.f32 %v840, 1.0
  %v916 = vadd.f32 %v842, 1.0
  %v917 = vadd.f32 %v844, 1.0
  %v918 = vadd.f32 %v846, 1.0
  %v919 = vadd.f32 %v848, 1.0
  %v920 = vadd.f32 %v850, 1.0
  %v921 = vadd.f32 %v852, 1.0
  %v922 = vadd.f32 %v854, 1.0
  %v923 = vadd.f32 %v856, 1.0
  %v924 = vadd.f32 %v858, 1.0
  %v925 = vadd.f32 %v860, 1.0
  %v926 = vadd.f32 %v862, 1.0
  %v927 = vrcp.pop %v863
  %v928 = vmul.f32 1.0, %v927
  %v929 = vrcp.pop %v864
  %v930 = vmul.f32 1.0, %v929
  %v931 = vrcp.pop %v865
  %v932 = vmul.f32 1.0, %v931
  %v933 = vrcp.pop %v866
  %v934 = vmul.f32 1.0, %v933
  %v935 = vrcp.pop %v867
  %v936 = vmul.f32 1.0, %v935
  %v937 = vrcp.pop %v868
  %v938 = vmul.f32 1.0, %v937
  %v939 = vrcp.pop %v869
  %v940 = vmul.f32 1.0, %v939
  %v941 = vrcp.pop %v870
  %v942 = vmul.f32 1.0, %v941
  %v943 = vrcp.pop %v871
  %v944 = vmul.f32 1.0, %v943
  %v945 = vrcp.pop %v872
  %v946 = vmul.f32 1.0, %v945
  %v947 = vrcp.pop %v873
  %v948 = vmul.f32 1.0, %v947
  %v949 = vrcp.pop %v874
  %v950 = vmul.f32 1.0, %v949
  %v951 = vrcp.pop %v875
  %v952 = vmul.f32 1.0, %v951
  %v953 = vrcp.pop %v876
  %v954 = vmul.f32 1.0, %v953
  %v955 = vrcp.pop %v877
  %v956 = vmul.f32 1.0, %v955
  %v957 = vrcp.pop %v878
  %v958 = vmul.f32 1.0, %v957
  %v959 = vrcp.pop %v879
  %v960 = vmul.f32 1.0, %v959
  %v961 = vrcp.pop %v880
  %v962 = vmul.f32 1.0, %v961
  %v963 = vrcp.pop %v881
  %v964 = vmul.f32 1.0, %v963
  %v965 = vrcp.pop %v882
  %v966 = vmul.f32 1.0, %v965
  %v967 = vrcp.pop %v883
  %v968 = vmul.f32 1.0, %v967
  %v969 = vrcp.pop %v884
  %v970 = vmul.f32 1.0, %v969
  %v971 = vrcp.pop %v885
  %v972 = vmul.f32 1.0, %v971
  %v973 = vrcp.pop %v886
  %v974 = vmul.f32 1.0, %v973
  %v975 = vrcp.pop %v887
  %v976 = vmul.f32 1.0, %v975
  %v977 = vrcp.pop %v888
  %v978 = vmul.f32 1.0, %v977
  %v979 = vrcp.pop %v889
  %v980 = vmul.f32 1.0, %v979
  %v981 = vrcp.pop %v890
  %v982 = vmul.f32 1.0, %v981
  %v983 = vrcp.pop %v891
  %v984 = vmul.f32 1.0, %v983
  %v985 = vrcp.pop %v892
  %v986 = vmul.f32 1.0, %v985
  %v987 = vrcp.pop %v893
  %v988 = vmul.f32 1.0, %v987
  %v989 = vrcp.pop %v894
  %v990 = vmul.f32 1.0, %v989
  %v991 = vrcp.pop %v895
  %v992 = vmul.f32 1.0, %v991
  %v993 = vrcp.pop %v896
  %v994 = vmul.f32 1.0, %v993
  %v995 = vrcp.pop %v897
  %v996 = vmul.f32 1.0, %v995
  %v997 = vrcp.pop %v898
  %v998 = vmul.f32 1.0, %v997
  %v999 = vrcp.pop %v899
  %v1000 = vmul.f32 1.0, %v999
  %v1001 = vrcp.pop %v900
  %v1002 = vmul.f32 1.0, %v1001
  %v1003 = vrcp.pop %v901
  %v1004 = vmul.f32 1.0, %v1003
  %v1005 = vrcp.pop %v902
  %v1006 = vmul.f32 1.0, %v1005
  %v1007 = vrcp.pop %v903
  %v1008 = vmul.f32 1.0, %v1007
  %v1009 = vrcp.pop %v904
  %v1010 = vmul.f32 1.0, %v1009
  %v1011 = vrcp.pop %v905
  %v1012 = vmul.f32 1.0, %v1011
  %v1013 = vrcp.pop %v906
  %v1014 = vmul.f32 1.0, %v1013
  %v1015 = vrcp.pop %v907
  %v1016 = vmul.f32 1.0, %v1015
  %v1017 = vrcp.pop %v908
  %v1018 = vmul.f32 1.0, %v1017
  %v1019 = vrcp.pop %v909
  %v1020 = vmul.f32 1.0, %v1019
  %v1021 = vrcp.pop %v910
  %v1022 = vmul.f32 1.0, %v1021
  %v1023 = vrcp.pop %v911
  %v1024 = vmul.f32 1.0, %v1023
  %v1025 = vrcp.pop %v912
  %v1026 = vmul.f32 1.0, %v1025
  %v1027 = vrcp.pop %v913
  %v1028 = vmul.f32 1.0, %v1027
  %v1029 = vrcp.pop %v914
  %v1030 = vmul.f32 1.0, %v1029
  %v1031 = vrcp.pop %v915
  %v1032 = vmul.f32 1.0, %v1031
  %v1033 = vrcp.pop %v916
  %v1034 = vmul.f32 1.0, %v1033
  %v1035 = vrcp.pop %v917
  %v1036 = vmul.f32 1.0, %v1035
  %v1037 = vrcp.pop %v918
  %v1038 = vmul.f32 1.0, %v1037
  %v1039 = vrcp.pop %v919
  %v1040 = vmul.f32 1.0, %v1039
  %v1041 = vrcp.pop %v920
  %v1042 = vmul.f32 1.0, %v1041
  %v1043 = vrcp.pop %v921
  %v1044 = vmul.f32 1.0, %v1043
  %v1045 = vrcp.pop %v922
  %v1046 = vmul.f32 1.0, %v1045
  %v1047 = vrcp.pop %v923
  %v1048 = vmul.f32 1.0, %v1047
  %v1049 = vrcp.pop %v924
  %v1050 = vmul.f32 1.0, %v1049
  %v1051 = vrcp.pop %v925
  %v1052 = vmul.f32 1.0, %v1051
  %v1053 = vrcp.pop %v926
  %v1054 = vmul.f32 1.0, %v1053
  %v1055 = vld [vmem:[%s3] sm:$0xff]
  %v1056 = vld [vmem:[%s3 + $0x8] sm:$0xff]
  %v1057 = vld [vmem:[%s3 + $0x10] sm:$0xff]
  %v1058 = vld [vmem:[%s3 + $0x18] sm:$0xff]
  %v1059 = vld [vmem:[%s3 + $0x20] sm:$0xff]
  %v1060 = vld [vmem:[%s3 + $0x28] sm:$0xff]
  %v1061 = vld [vmem:[%s3 + $0x30] sm:$0xff]
  %v1062 = vld [vmem:[%s3 + $0x38] sm:$0xff]
  %v1063 = vld [vmem:[%s3 + $0x40] sm:$0xff]
  %v1064 = vld [vmem:[%s3 + $0x48] sm:$0xff]
  %v1065 = vld [vmem:[%s3 + $0x50] sm:$0xff]
  %v1066 = vld [vmem:[%s3 + $0x58] sm:$0xff]
  %v1067 = vld [vmem:[%s3 + $0x60] sm:$0xff]
  %v1068 = vld [vmem:[%s3 + $0x68] sm:$0xff]
  %v1069 = vld [vmem:[%s3 + $0x70] sm:$0xff]
  %v1070 = vld [vmem:[%s3 + $0x78] sm:$0xff]
  %v1071 = vld [vmem:[%s4] sm:$0x1]
  %v1073 = vlaneseq
  %v1074 = vshrl.u32 %v1073, 7
  %v1075 = vsub.s32 0, %v1074
  %v1076 = vrot.slane %v1071, %v1075
  %1078 = vmatprep.subr.mxu0 0.0
  %1079 = vmatpush1.msra.mxu0 %v1055
  %1080 = vmatprep.subr.mxu0 0.0
  %1081 = vmatpush1.msra.mxu0 %v1056
  %1082 = vmatprep.subr.mxu0 0.0
  %1083 = vmatpush1.msra.mxu0 %v1057
  %1084 = vmatprep.subr.mxu0 0.0
  %1085 = vmatpush1.msra.mxu0 %v1058
  %1086 = vmatprep.subr.mxu0 0.0
  %1087 = vmatpush1.msra.mxu0 %v1059
  %1088 = vmatprep.subr.mxu0 0.0
  %1089 = vmatpush1.msra.mxu0 %v1060
  %1090 = vmatprep.subr.mxu0 0.0
  %1091 = vmatpush1.msra.mxu0 %v1061
  %1092 = vmatprep.subr.mxu0 0.0
  %1093 = vmatpush1.msra.mxu0 %v1062
  %1094 = vmatprep.subr.mxu0 0.0
  %1095 = vmatpush1.msra.mxu0 %v1063
  %1096 = vmatprep.subr.mxu0 0.0
  %1097 = vmatpush1.msra.mxu0 %v1064
  %1098 = vmatprep.subr.mxu0 0.0
  %1099 = vmatpush1.msra.mxu0 %v1065
  %1100 = vmatprep.subr.mxu0 0.0
  %1101 = vmatpush1.msra.mxu0 %v1066
  %1102 = vmatprep.subr.mxu0 0.0
  %1103 = vmatpush1.msra.mxu0 %v1067
  %1104 = vmatprep.subr.mxu0 0.0
  %1105 = vmatpush1.msra.mxu0 %v1068
  %1106 = vmatprep.subr.mxu0 0.0
  %1107 = vmatpush1.msra.mxu0 %v1069
  %1108 = vmatprep.subr.mxu0 0.0
  %1109 = vmatpush1.msra.mxu0 %v1070
  %1110 = vmatprep.subr.mxu0 0.0
  %1111 = vmatpush1.msra.mxu0 0.0
  %1112 = vmatprep.subr.mxu0 0.0
  %1113 = vmatpush1.msra.mxu0 0.0
  %1114 = vmatprep.subr.mxu0 0.0
  %1115 = vmatpush1.msra.mxu0 0.0
  %1116 = vmatprep.subr.mxu0 0.0
  %1117 = vmatpush1.msra.mxu0 0.0
  %1118 = vmatprep.subr.mxu0 0.0
  %1119 = vmatpush1.msra.mxu0 0.0
  %1120 = vmatprep.subr.mxu0 0.0
  %1121 = vmatpush1.msra.mxu0 0.0
  %1122 = vmatprep.subr.mxu0 0.0
  %1123 = vmatpush1.msra.mxu0 0.0
  %1124 = vmatprep.subr.mxu0 0.0
  %1125 = vmatpush1.msra.mxu0 0.0
  %1126 = vmatprep.subr.mxu0 0.0
  %1127 = vmatpush1.msra.mxu0 0.0
  %1128 = vmatprep.subr.mxu0 0.0
  %1129 = vmatpush1.msra.mxu0 0.0
  %1130 = vmatprep.subr.mxu0 0.0
  %1131 = vmatpush1.msra.mxu0 0.0
  %1132 = vmatprep.subr.mxu0 0.0
  %1133 = vmatpush1.msra.mxu0 0.0
  %1134 = vmatprep.subr.mxu0 0.0
  %1135 = vmatpush1.msra.mxu0 0.0
  %1136 = vmatprep.subr.mxu0 0.0
  %1137 = vmatpush1.msra.mxu0 0.0
  %1138 = vmatprep.subr.mxu0 0.0
  %1139 = vmatpush1.msra.mxu0 0.0
  %1140 = vmatprep.subr.mxu0 0.0
  %1141 = vmatpush1.msra.mxu0 0.0
  %1142 = vmatprep.mubr.f32.mxu0 0.0
  %1143 = vmatmul.mubr.f32.gmra.mrb[0].mxu0 %v928
  %v1144 = vpop.f32.mrb[0].mxu0
  %v1145 = vadd.f32 %v1076, %v1144
  %v1146 = vpop.f32.mrb[0].mxu0
  %1147 = vmatprep.mubr.f32.mxu0 0.0
  %1148 = vmatmul.mubr.f32.gmra.mrb[0].mxu0 %v930
  %v1149 = vpop.f32.mrb[0].mxu0
  %v1150 = vadd.f32 %v1076, %v1149
  %v1151 = vpop.f32.mrb[0].mxu0
  %1152 = vmatprep.mubr.f32.mxu0 0.0
  %1153 = vmatmul.mubr.f32.gmra.mrb[0].mxu0 %v932
  %v1154 = vpop.f32.mrb[0].mxu0
  %v1155 = vadd.f32 %v1076, %v1154
  %v1156 = vpop.f32.mrb[0].mxu0
  %1157 = vmatprep.mubr.f32.mxu0 0.0
  %1158 = vmatmul.mubr.f32.gmra.mrb[0].mxu0 %v934
  %v1159 = vpop.f32.mrb[0].mxu0
  %v1160 = vadd.f32 %v1076, %v1159
  %v1161 = vpop.f32.mrb[0].mxu0
  %1162 = vmatprep.mubr.f32.mxu0 0.0
  %1163 = vmatmul.mubr.f32.gmra.mrb[0].mxu0 %v936
  %v1164 = vpop.f32.mrb[0].mxu0
  %v1165 = vadd.f32 %v1076, %v1164
  %v1166 = vpop.f32.mrb[0].mxu0
  %1167 = vmatprep.mubr.f32.mxu0 0.0
  %1168 = vmatmul.mubr.f32.gmra.mrb[0].mxu0 %v938
  %v1169 = vpop.f32.mrb[0].mxu0
  %v1170 = vadd.f32 %v1076, %v1169
  %v1171 = vpop.f32.mrb[0].mxu0
  %1172 = vmatprep.mubr.f32.mxu0 0.0
  %1173 = vmatmul.mubr.f32.gmra.mrb[0].mxu0 %v940
  %v1174 = vpop.f32.mrb[0].mxu0
  %v1175 = vadd.f32 %v1076, %v1174
  %v1176 = vpop.f32.mrb[0].mxu0
  %1177 = vmatprep.mubr.f32.mxu0 0.0
  %1178 = vmatmul.mubr.f32.gmra.mrb[0].mxu0 %v942
  %v1179 = vpop.f32.mrb[0].mxu0
  %v1180 = vadd.f32 %v1076, %v1179
  %v1181 = vpop.f32.mrb[0].mxu0
  %1182 = vmatprep.mubr.f32.mxu0 0.0
  %1183 = vmatmul.mubr.f32.gmra.mrb[0].mxu0 %v944
  %v1184 = vpop.f32.mrb[0].mxu0
  %v1185 = vadd.f32 %v1076, %v1184
  %v1186 = vpop.f32.mrb[0].mxu0
  %1187 = vmatprep.mubr.f32.mxu0 0.0
  %1188 = vmatmul.mubr.f32.gmra.mrb[0].mxu0 %v946
  %v1189 = vpop.f32.mrb[0].mxu0
  %v1190 = vadd.f32 %v1076, %v1189
  %v1191 = vpop.f32.mrb[0].mxu0
  %1192 = vmatprep.mubr.f32.mxu0 0.0
  %1193 = vmatmul.mubr.f32.gmra.mrb[0].mxu0 %v948
  %v1194 = vpop.f32.mrb[0].mxu0
  %v1195 = vadd.f32 %v1076, %v1194
  %v1196 = vpop.f32.mrb[0].mxu0
  %1197 = vmatprep.mubr.f32.mxu0 0.0
  %1198 = vmatmul.mubr.f32.gmra.mrb[0].mxu0 %v950
  %v1199 = vpop.f32.mrb[0].mxu0
  %v1200 = vadd.f32 %v1076, %v1199
  %v1201 = vpop.f32.mrb[0].mxu0
  %1202 = vmatprep.mubr.f32.mxu0 0.0
  %1203 = vmatmul.mubr.f32.gmra.mrb[0].mxu0 %v952
  %v1204 = vpop.f32.mrb[0].mxu0
  %v1205 = vadd.f32 %v1076, %v1204
  %v1206 = vpop.f32.mrb[0].mxu0
  %1207 = vmatprep.mubr.f32.mxu0 0.0
  %1208 = vmatmul.mubr.f32.gmra.mrb[0].mxu0 %v954
  %v1209 = vpop.f32.mrb[0].mxu0
  %v1210 = vadd.f32 %v1076, %v1209
  %v1211 = vpop.f32.mrb[0].mxu0
  %1212 = vmatprep.mubr.f32.mxu0 0.0
  %1213 = vmatmul.mubr.f32.gmra.mrb[0].mxu0 %v956
  %v1214 = vpop.f32.mrb[0].mxu0
  %v1215 = vadd.f32 %v1076, %v1214
  %v1216 = vpop.f32.mrb[0].mxu0
  %1217 = vmatprep.mubr.f32.mxu0 0.0
  %1218 = vmatmul.mubr.f32.gmra.mrb[0].mxu0 %v958
  %v1219 = vpop.f32.mrb[0].mxu0
  %v1220 = vadd.f32 %v1076, %v1219
  %v1221 = vpop.f32.mrb[0].mxu0
  %1222 = vmatprep.mubr.f32.mxu0 0.0
  %1223 = vmatmul.mubr.f32.gmra.mrb[0].mxu0 %v960
  %v1224 = vpop.f32.mrb[0].mxu0
  %v1225 = vadd.f32 %v1076, %v1224
  %v1226 = vpop.f32.mrb[0].mxu0
  %1227 = vmatprep.mubr.f32.mxu0 0.0
  %1228 = vmatmul.mubr.f32.gmra.mrb[0].mxu0 %v962
  %v1229 = vpop.f32.mrb[0].mxu0
  %v1230 = vadd.f32 %v1076, %v1229
  %v1231 = vpop.f32.mrb[0].mxu0
  %1232 = vmatprep.mubr.f32.mxu0 0.0
  %1233 = vmatmul.mubr.f32.gmra.mrb[0].mxu0 %v964
  %v1234 = vpop.f32.mrb[0].mxu0
  %v1235 = vadd.f32 %v1076, %v1234
  %v1236 = vpop.f32.mrb[0].mxu0
  %1237 = vmatprep.mubr.f32.mxu0 0.0
  %1238 = vmatmul.mubr.f32.gmra.mrb[0].mxu0 %v966
  %v1239 = vpop.f32.mrb[0].mxu0
  %v1240 = vadd.f32 %v1076, %v1239
  %v1241 = vpop.f32.mrb[0].mxu0
  %1242 = vmatprep.mubr.f32.mxu0 0.0
  %1243 = vmatmul.mubr.f32.gmra.mrb[0].mxu0 %v968
  %v1244 = vpop.f32.mrb[0].mxu0
  %v1245 = vadd.f32 %v1076, %v1244
  %v1246 = vpop.f32.mrb[0].mxu0
  %1247 = vmatprep.mubr.f32.mxu0 0.0
  %1248 = vmatmul.mubr.f32.gmra.mrb[0].mxu0 %v970
  %v1249 = vpop.f32.mrb[0].mxu0
  %v1250 = vadd.f32 %v1076, %v1249
  %v1251 = vpop.f32.mrb[0].mxu0
  %1252 = vmatprep.mubr.f32.mxu0 0.0
  %1253 = vmatmul.mubr.f32.gmra.mrb[0].mxu0 %v972
  %v1254 = vpop.f32.mrb[0].mxu0
  %v1255 = vadd.f32 %v1076, %v1254
  %v1256 = vpop.f32.mrb[0].mxu0
  %1257 = vmatprep.mubr.f32.mxu0 0.0
  %1258 = vmatmul.mubr.f32.gmra.mrb[0].mxu0 %v974
  %v1259 = vpop.f32.mrb[0].mxu0
  %v1260 = vadd.f32 %v1076, %v1259
  %v1261 = vpop.f32.mrb[0].mxu0
  %1262 = vmatprep.mubr.f32.mxu0 0.0
  %1263 = vmatmul.mubr.f32.gmra.mrb[0].mxu0 %v976
  %v1264 = vpop.f32.mrb[0].mxu0
  %v1265 = vadd.f32 %v1076, %v1264
  %v1266 = vpop.f32.mrb[0].mxu0
  %1267 = vmatprep.mubr.f32.mxu0 0.0
  %1268 = vmatmul.mubr.f32.gmra.mrb[0].mxu0 %v978
  %v1269 = vpop.f32.mrb[0].mxu0
  %v1270 = vadd.f32 %v1076, %v1269
  %v1271 = vpop.f32.mrb[0].mxu0
  %1272 = vmatprep.mubr.f32.mxu0 0.0
  %1273 = vmatmul.mubr.f32.gmra.mrb[0].mxu0 %v980
  %v1274 = vpop.f32.mrb[0].mxu0
  %v1275 = vadd.f32 %v1076, %v1274
  %v1276 = vpop.f32.mrb[0].mxu0
  %1277 = vmatprep.mubr.f32.mxu0 0.0
  %1278 = vmatmul.mubr.f32.gmra.mrb[0].mxu0 %v982
  %v1279 = vpop.f32.mrb[0].mxu0
  %v1280 = vadd.f32 %v1076, %v1279
  %v1281 = vpop.f32.mrb[0].mxu0
  %1282 = vmatprep.mubr.f32.mxu0 0.0
  %1283 = vmatmul.mubr.f32.gmra.mrb[0].mxu0 %v984
  %v1284 = vpop.f32.mrb[0].mxu0
  %v1285 = vadd.f32 %v1076, %v1284
  %v1286 = vpop.f32.mrb[0].mxu0
  %1287 = vmatprep.mubr.f32.mxu0 0.0
  %1288 = vmatmul.mubr.f32.gmra.mrb[0].mxu0 %v986
  %v1289 = vpop.f32.mrb[0].mxu0
  %v1290 = vadd.f32 %v1076, %v1289
  %v1291 = vpop.f32.mrb[0].mxu0
  %1292 = vmatprep.mubr.f32.mxu0 0.0
  %1293 = vmatmul.mubr.f32.gmra.mrb[0].mxu0 %v988
  %v1294 = vpop.f32.mrb[0].mxu0
  %v1295 = vadd.f32 %v1076, %v1294
  %v1296 = vpop.f32.mrb[0].mxu0
  %1297 = vmatprep.mubr.f32.mxu0 0.0
  %1298 = vmatmul.mubr.f32.gmra.mrb[0].mxu0 %v990
  %v1299 = vpop.f32.mrb[0].mxu0
  %v1300 = vadd.f32 %v1076, %v1299
  %v1301 = vpop.f32.mrb[0].mxu0
  %1302 = vmatprep.mubr.f32.mxu0 0.0
  %1303 = vmatmul.mubr.f32.gmra.mrb[0].mxu0 %v992
  %v1304 = vpop.f32.mrb[0].mxu0
  %v1305 = vadd.f32 %v1076, %v1304
  %v1306 = vpop.f32.mrb[0].mxu0
  %1307 = vmatprep.mubr.f32.mxu0 0.0
  %1308 = vmatmul.mubr.f32.gmra.mrb[0].mxu0 %v994
  %v1309 = vpop.f32.mrb[0].mxu0
  %v1310 = vadd.f32 %v1076, %v1309
  %v1311 = vpop.f32.mrb[0].mxu0
  %1312 = vmatprep.mubr.f32.mxu0 0.0
  %1313 = vmatmul.mubr.f32.gmra.mrb[0].mxu0 %v996
  %v1314 = vpop.f32.mrb[0].mxu0
  %v1315 = vadd.f32 %v1076, %v1314
  %v1316 = vpop.f32.mrb[0].mxu0
  %1317 = vmatprep.mubr.f32.mxu0 0.0
  %1318 = vmatmul.mubr.f32.gmra.mrb[0].mxu0 %v998
  %v1319 = vpop.f32.mrb[0].mxu0
  %v1320 = vadd.f32 %v1076, %v1319
  %v1321 = vpop.f32.mrb[0].mxu0
  %1322 = vmatprep.mubr.f32.mxu0 0.0
  %1323 = vmatmul.mubr.f32.gmra.mrb[0].mxu0 %v1000
  %v1324 = vpop.f32.mrb[0].mxu0
  %v1325 = vadd.f32 %v1076, %v1324
  %v1326 = vpop.f32.mrb[0].mxu0
  %1327 = vmatprep.mubr.f32.mxu0 0.0
  %1328 = vmatmul.mubr.f32.gmra.mrb[0].mxu0 %v1002
  %v1329 = vpop.f32.mrb[0].mxu0
  %v1330 = vadd.f32 %v1076, %v1329
  %v1331 = vpop.f32.mrb[0].mxu0
  %1332 = vmatprep.mubr.f32.mxu0 0.0
  %1333 = vmatmul.mubr.f32.gmra.mrb[0].mxu0 %v1004
  %v1334 = vpop.f32.mrb[0].mxu0
  %v1335 = vadd.f32 %v1076, %v1334
  %v1336 = vpop.f32.mrb[0].mxu0
  %1337 = vmatprep.mubr.f32.mxu0 0.0
  %1338 = vmatmul.mubr.f32.gmra.mrb[0].mxu0 %v1006
  %v1339 = vpop.f32.mrb[0].mxu0
  %v1340 = vadd.f32 %v1076, %v1339
  %v1341 = vpop.f32.mrb[0].mxu0
  %1342 = vmatprep.mubr.f32.mxu0 0.0
  %1343 = vmatmul.mubr.f32.gmra.mrb[0].mxu0 %v1008
  %v1344 = vpop.f32.mrb[0].mxu0
  %v1345 = vadd.f32 %v1076, %v1344
  %v1346 = vpop.f32.mrb[0].mxu0
  %1347 = vmatprep.mubr.f32.mxu0 0.0
  %1348 = vmatmul.mubr.f32.gmra.mrb[0].mxu0 %v1010
  %v1349 = vpop.f32.mrb[0].mxu0
  %v1350 = vadd.f32 %v1076, %v1349
  %v1351 = vpop.f32.mrb[0].mxu0
  %1352 = vmatprep.mubr.f32.mxu0 0.0
  %1353 = vmatmul.mubr.f32.gmra.mrb[0].mxu0 %v1012
  %v1354 = vpop.f32.mrb[0].mxu0
  %v1355 = vadd.f32 %v1076, %v1354
  %v1356 = vpop.f32.mrb[0].mxu0
  %1357 = vmatprep.mubr.f32.mxu0 0.0
  %1358 = vmatmul.mubr.f32.gmra.mrb[0].mxu0 %v1014
  %v1359 = vpop.f32.mrb[0].mxu0
  %v1360 = vadd.f32 %v1076, %v1359
  %v1361 = vpop.f32.mrb[0].mxu0
  %1362 = vmatprep.mubr.f32.mxu0 0.0
  %1363 = vmatmul.mubr.f32.gmra.mrb[0].mxu0 %v1016
  %v1364 = vpop.f32.mrb[0].mxu0
  %v1365 = vadd.f32 %v1076, %v1364
  %v1366 = vpop.f32.mrb[0].mxu0
  %1367 = vmatprep.mubr.f32.mxu0 0.0
  %1368 = vmatmul.mubr.f32.gmra.mrb[0].mxu0 %v1018
  %v1369 = vpop.f32.mrb[0].mxu0
  %v1370 = vadd.f32 %v1076, %v1369
  %v1371 = vpop.f32.mrb[0].mxu0
  %1372 = vmatprep.mubr.f32.mxu0 0.0
  %1373 = vmatmul.mubr.f32.gmra.mrb[0].mxu0 %v1020
  %v1374 = vpop.f32.mrb[0].mxu0
  %v1375 = vadd.f32 %v1076, %v1374
  %v1376 = vpop.f32.mrb[0].mxu0
  %1377 = vmatprep.mubr.f32.mxu0 0.0
  %1378 = vmatmul.mubr.f32.gmra.mrb[0].mxu0 %v1022
  %v1379 = vpop.f32.mrb[0].mxu0
  %v1380 = vadd.f32 %v1076, %v1379
  %v1381 = vpop.f32.mrb[0].mxu0
  %1382 = vmatprep.mubr.f32.mxu0 0.0
  %1383 = vmatmul.mubr.f32.gmra.mrb[0].mxu0 %v1024
  %v1384 = vpop.f32.mrb[0].mxu0
  %v1385 = vadd.f32 %v1076, %v1384
  %v1386 = vpop.f32.mrb[0].mxu0
  %1387 = vmatprep.mubr.f32.mxu0 0.0
  %1388 = vmatmul.mubr.f32.gmra.mrb[0].mxu0 %v1026
  %v1389 = vpop.f32.mrb[0].mxu0
  %v1390 = vadd.f32 %v1076, %v1389
  %v1391 = vpop.f32.mrb[0].mxu0
  %1392 = vmatprep.mubr.f32.mxu0 0.0
  %1393 = vmatmul.mubr.f32.gmra.mrb[0].mxu0 %v1028
  %v1394 = vpop.f32.mrb[0].mxu0
  %v1395 = vadd.f32 %v1076, %v1394
  %v1396 = vpop.f32.mrb[0].mxu0
  %1397 = vmatprep.mubr.f32.mxu0 0.0
  %1398 = vmatmul.mubr.f32.gmra.mrb[0].mxu0 %v1030
  %v1399 = vpop.f32.mrb[0].mxu0
  %v1400 = vadd.f32 %v1076, %v1399
  %v1401 = vpop.f32.mrb[0].mxu0
  %1402 = vmatprep.mubr.f32.mxu0 0.0
  %1403 = vmatmul.mubr.f32.gmra.mrb[0].mxu0 %v1032
  %v1404 = vpop.f32.mrb[0].mxu0
  %v1405 = vadd.f32 %v1076, %v1404
  %v1406 = vpop.f32.mrb[0].mxu0
  %1407 = vmatprep.mubr.f32.mxu0 0.0
  %1408 = vmatmul.mubr.f32.gmra.mrb[0].mxu0 %v1034
  %v1409 = vpop.f32.mrb[0].mxu0
  %v1410 = vadd.f32 %v1076, %v1409
  %v1411 = vpop.f32.mrb[0].mxu0
  %1412 = vmatprep.mubr.f32.mxu0 0.0
  %1413 = vmatmul.mubr.f32.gmra.mrb[0].mxu0 %v1036
  %v1414 = vpop.f32.mrb[0].mxu0
  %v1415 = vadd.f32 %v1076, %v1414
  %v1416 = vpop.f32.mrb[0].mxu0
  %1417 = vmatprep.mubr.f32.mxu0 0.0
  %1418 = vmatmul.mubr.f32.gmra.mrb[0].mxu0 %v1038
  %v1419 = vpop.f32.mrb[0].mxu0
  %v1420 = vadd.f32 %v1076, %v1419
  %v1421 = vpop.f32.mrb[0].mxu0
  %1422 = vmatprep.mubr.f32.mxu0 0.0
  %1423 = vmatmul.mubr.f32.gmra.mrb[0].mxu0 %v1040
  %v1424 = vpop.f32.mrb[0].mxu0
  %v1425 = vadd.f32 %v1076, %v1424
  %v1426 = vpop.f32.mrb[0].mxu0
  %1427 = vmatprep.mubr.f32.mxu0 0.0
  %1428 = vmatmul.mubr.f32.gmra.mrb[0].mxu0 %v1042
  %v1429 = vpop.f32.mrb[0].mxu0
  %v1430 = vadd.f32 %v1076, %v1429
  %v1431 = vpop.f32.mrb[0].mxu0
  %1432 = vmatprep.mubr.f32.mxu0 0.0
  %1433 = vmatmul.mubr.f32.gmra.mrb[0].mxu0 %v1044
  %v1434 = vpop.f32.mrb[0].mxu0
  %v1435 = vadd.f32 %v1076, %v1434
  %v1436 = vpop.f32.mrb[0].mxu0
  %1437 = vmatprep.mubr.f32.mxu0 0.0
  %1438 = vmatmul.mubr.f32.gmra.mrb[0].mxu0 %v1046
  %v1439 = vpop.f32.mrb[0].mxu0
  %v1440 = vadd.f32 %v1076, %v1439
  %v1441 = vpop.f32.mrb[0].mxu0
  %1442 = vmatprep.mubr.f32.mxu0 0.0
  %1443 = vmatmul.mubr.f32.gmra.mrb[0].mxu0 %v1048
  %v1444 = vpop.f32.mrb[0].mxu0
  %v1445 = vadd.f32 %v1076, %v1444
  %v1446 = vpop.f32.mrb[0].mxu0
  %1447 = vmatprep.mubr.f32.mxu0 0.0
  %1448 = vmatmul.mubr.f32.gmra.mrb[0].mxu0 %v1050
  %v1449 = vpop.f32.mrb[0].mxu0
  %v1450 = vadd.f32 %v1076, %v1449
  %v1451 = vpop.f32.mrb[0].mxu0
  %1452 = vmatprep.mubr.f32.mxu0 0.0
  %1453 = vmatmul.mubr.f32.gmra.mrb[0].mxu0 %v1052
  %v1454 = vpop.f32.mrb[0].mxu0
  %v1455 = vadd.f32 %v1076, %v1454
  %v1456 = vpop.f32.mrb[0].mxu0
  %1457 = vmatprep.mubr.f32.mxu0 0.0
  %1458 = vmatmul.mubr.f32.gmra.mrb[0].mxu0 %v1054
  %v1459 = vpop.f32.mrb[0].mxu0
  %v1460 = vadd.f32 %v1076, %v1459
  %v1461 = vpop.f32.mrb[0].mxu0
  %1462 = vdwg.mxu0
  %1463 = vst [vmem:[%s5] sm:$0xff] %v1145
  %1464 = vst [vmem:[%s5 + $0x8] sm:$0xff] %v1150
  %1465 = vst [vmem:[%s5 + $0x10] sm:$0xff] %v1155
  %1466 = vst [vmem:[%s5 + $0x18] sm:$0xff] %v1160
  %1467 = vst [vmem:[%s5 + $0x20] sm:$0xff] %v1165
  %1468 = vst [vmem:[%s5 + $0x28] sm:$0xff] %v1170
  %1469 = vst [vmem:[%s5 + $0x30] sm:$0xff] %v1175
  %1470 = vst [vmem:[%s5 + $0x38] sm:$0xff] %v1180
  %1471 = vst [vmem:[%s5 + $0x40] sm:$0xff] %v1185
  %1472 = vst [vmem:[%s5 + $0x48] sm:$0xff] %v1190
  %1473 = vst [vmem:[%s5 + $0x50] sm:$0xff] %v1195
  %1474 = vst [vmem:[%s5 + $0x58] sm:$0xff] %v1200
  %1475 = vst [vmem:[%s5 + $0x60] sm:$0xff] %v1205
  %1476 = vst [vmem:[%s5 + $0x68] sm:$0xff] %v1210
  %1477 = vst [vmem:[%s5 + $0x70] sm:$0xff] %v1215
  %1478 = vst [vmem:[%s5 + $0x78] sm:$0xff] %v1220
  %1479 = vst [vmem:[%s5 + $0x80] sm:$0xff] %v1225
  %1480 = vst [vmem:[%s5 + $0x88] sm:$0xff] %v1230
  %1481 = vst [vmem:[%s5 + $0x90] sm:$0xff] %v1235
  %1482 = vst [vmem:[%s5 + $0x98] sm:$0xff] %v1240
  %1483 = vst [vmem:[%s5 + $0xa0] sm:$0xff] %v1245
  %1484 = vst [vmem:[%s5 + $0xa8] sm:$0xff] %v1250
  %1485 = vst [vmem:[%s5 + $0xb0] sm:$0xff] %v1255
  %1486 = vst [vmem:[%s5 + $0xb8] sm:$0xff] %v1260
  %1487 = vst [vmem:[%s5 + $0xc0] sm:$0xff] %v1265
  %1488 = vst [vmem:[%s5 + $0xc8] sm:$0xff] %v1270
  %1489 = vst [vmem:[%s5 + $0xd0] sm:$0xff] %v1275
  %1490 = vst [vmem:[%s5 + $0xd8] sm:$0xff] %v1280
  %1491 = vst [vmem:[%s5 + $0xe0] sm:$0xff] %v1285
  %1492 = vst [vmem:[%s5 + $0xe8] sm:$0xff] %v1290
  %1493 = vst [vmem:[%s5 + $0xf0] sm:$0xff] %v1295
  %1494 = vst [vmem:[%s5 + $0xf8] sm:$0xff] %v1300
  %1495 = vst [vmem:[%s5 + $0x100] sm:$0xff] %v1305
  %1496 = vst [vmem:[%s5 + $0x108] sm:$0xff] %v1310
  %1497 = vst [vmem:[%s5 + $0x110] sm:$0xff] %v1315
  %1498 = vst [vmem:[%s5 + $0x118] sm:$0xff] %v1320
  %1499 = vst [vmem:[%s5 + $0x120] sm:$0xff] %v1325
  %1500 = vst [vmem:[%s5 + $0x128] sm:$0xff] %v1330
  %1501 = vst [vmem:[%s5 + $0x130] sm:$0xff] %v1335
  %1502 = vst [vmem:[%s5 + $0x138] sm:$0xff] %v1340
  %1503 = vst [vmem:[%s5 + $0x140] sm:$0xff] %v1345
  %1504 = vst [vmem:[%s5 + $0x148] sm:$0xff] %v1350
  %1505 = vst [vmem:[%s5 + $0x150] sm:$0xff] %v1355
  %1506 = vst [vmem:[%s5 + $0x158] sm:$0xff] %v1360
  %1507 = vst [vmem:[%s5 + $0x160] sm:$0xff] %v1365
  %1508 = vst [vmem:[%s5 + $0x168] sm:$0xff] %v1370
  %1509 = vst [vmem:[%s5 + $0x170] sm:$0xff] %v1375
  %1510 = vst [vmem:[%s5 + $0x178] sm:$0xff] %v1380
  %1511 = vst [vmem:[%s5 + $0x180] sm:$0xff] %v1385
  %1512 = vst [vmem:[%s5 + $0x188] sm:$0xff] %v1390
  %1513 = vst [vmem:[%s5 + $0x190] sm:$0xff] %v1395
  %1514 = vst [vmem:[%s5 + $0x198] sm:$0xff] %v1400
  %1515 = vst [vmem:[%s5 + $0x1a0] sm:$0xff] %v1405
  %1516 = vst [vmem:[%s5 + $0x1a8] sm:$0xff] %v1410
  %1517 = vst [vmem:[%s5 + $0x1b0] sm:$0xff] %v1415
  %1518 = vst [vmem:[%s5 + $0x1b8] sm:$0xff] %v1420
  %1519 = vst [vmem:[%s5 + $0x1c0] sm:$0xff] %v1425
  %1520 = vst [vmem:[%s5 + $0x1c8] sm:$0xff] %v1430
  %1521 = vst [vmem:[%s5 + $0x1d0] sm:$0xff] %v1435
  %1522 = vst [vmem:[%s5 + $0x1d8] sm:$0xff] %v1440
  %1523 = vst [vmem:[%s5 + $0x1e0] sm:$0xff] %v1445
  %1524 = vst [vmem:[%s5 + $0x1e8] sm:$0xff] %v1450
  %1525 = vst [vmem:[%s5 + $0x1f0] sm:$0xff] %v1455
  %1526 = vst [vmem:[%s5 + $0x1f8] sm:$0xff] %v1460
  // Predicated region
  $region22: #{forward.1} parent=0 // pred_check
    _
  $region23: #{forward.1} parent=0 // pred_check_branch
    %1528 = sbr.rel (0) target = $region25
  $region24: #{forward.1} parent=0 // pred_region
    _
  $region25: #{forward.1} parent=0 // pred_fallthru
    _
  // Predicated region
  $region26: #{forward.1} parent=0 // pred_check
    _
  $region27: #{forward.1} parent=0 // pred_check_branch
    %1530 = sbr.rel (0) target = $region29
  $region28: #{forward.1} parent=0 // pred_region
    _
  $region29: #{forward.1} parent=0 // pred_fallthru
    _

</llo_original>
